<compile_context>
chip_gen: v5e
topology: v5e:2x2
jax: 0.10.0
libtpu: 0.0.40
codegen_flags: <defaults>
</compile_context>

<pallas_src>
import jax
import jax.numpy as jnp
from jax.experimental import pallas as pl
from jax.experimental.pallas import tpu as pltpu

_LANE_WIDTH = 1024  # lane-dense last dim (multiple of 128 -> no masked vst)


def _identity_kernel(x_ref, o_ref):
    # Straight copy of the current VMEM tile.
    o_ref[...] = x_ref[...]


def _sublane_multiple(dtype) -> int:
    # Second-to-last dim packs along sublanes for sub-32-bit dtypes.
    itemsize = jnp.dtype(dtype).itemsize
    return {1: 32, 2: 16, 4: 8}.get(itemsize, 8)


def dummy_body_forward(x):
    """Identity forward pass of DummyBody routed through a Pallas copy kernel.

    Accepts any shape/dtype; returns an array equal to x.
    """
    orig_shape = x.shape
    dtype = x.dtype
    itemsize = jnp.dtype(dtype).itemsize
    sublane = _sublane_multiple(dtype)
    total = int(x.size)

    # Flatten + pad so the kernel sees a lane-dense (rows, 1024) slab.
    flat = x.reshape(-1)
    padded = pl.cdiv(total, _LANE_WIDTH) * _LANE_WIDTH
    if padded != total:
        flat = jnp.pad(flat, (0, padded - total))
    rows = padded // _LANE_WIDTH
    slab = flat.reshape(rows, _LANE_WIDTH)

    # ~2 MiB tiles; with double-buffered in + out (~4x tile bytes) this fits
    # every generation's default scoped VMEM (v5e 16 MiB, v6e/v7x 32 MiB).
    target_tile_bytes = 2 * 1024 * 1024
    block_rows = max(sublane, target_tile_bytes // (_LANE_WIDTH * itemsize))
    block_rows = (block_rows // sublane) * sublane

    if rows <= block_rows:
        if rows >= 2 * sublane:
            # Split into >=2 grid steps so v7x's 2 TensorCores both get work.
            half = (rows + 1) // 2
            block_rows = ((half + sublane - 1) // sublane) * sublane
        else:
            block_rows = rows  # single full-extent block (always legal)

    grid = (pl.cdiv(rows, block_rows),)

    out = pl.pallas_call(
        _identity_kernel,
        out_shape=jax.ShapeDtypeStruct((rows, _LANE_WIDTH), dtype),
        grid_spec=pltpu.PrefetchScalarGridSpec(
            num_scalar_prefetch=0,
            grid=grid,
            in_specs=[pl.BlockSpec((block_rows, _LANE_WIDTH), lambda i: (i, 0))],
            out_specs=pl.BlockSpec((block_rows, _LANE_WIDTH), lambda i: (i, 0)),
        ),
        compiler_params=pltpu.CompilerParams(
            dimension_semantics=("parallel",),
        ),
        # Identity copy: let XLA alias/donate the input buffer for the output
        # (XLA inserts a protective copy only when the input is still live).
        input_output_aliases={0: 0},
    )(slab)

    out = out.reshape(-1)
    if padded != total:
        out = out[:total]
    return out.reshape(orig_shape)


class DummyBodyPallas:
    """Mirror of the PyTorch DummyBody module (no parameters)."""

    def __init__(self, state_dim):
        self.feature_dim = state_dim

    def __call__(self, x):
        return dummy_body_forward(x)


if __name__ == "__main__":
    key = jax.random.PRNGKey(0)
    batch, state_dim = 8, 32
    x = jax.random.normal(key, (batch, state_dim), dtype=jnp.float32)

    model = DummyBodyPallas(state_dim)
    out = model(x)
    out = jax.block_until_ready(out)

    assert out.shape == x.shape and out.dtype == x.dtype
    assert bool(jnp.array_equal(out, x))
    print("KERNEL_OK")
</pallas_src>

<mosaic_0001>
module attributes {stable_mosaic.version = 11 : i64} {
  func.func @_identity_kernel(%arg0: i32, %arg1: memref<1x1024xf32, #tpu.memory_space<vmem>>, %arg2: memref<1x1024xf32, #tpu.memory_space<vmem>>) attributes {dimension_semantics = [#tpu.dimension_semantics<parallel>], iteration_bounds = array<i64: 1>, scalar_prefetch = 0 : i64, scratch_operands = 0 : i64, tpu.core_type = #tpu.core_type<tc>, window_params = [{transform_indices = @transform_0, window_bounds = array<i64: 1, 1024>}, {transform_indices = @transform_1, window_bounds = array<i64: 1, 1024>}]} {
    %c0 = arith.constant 0 : index
    %c0_0 = arith.constant 0 : index
    %0 = vector.load %arg1[%c0, %c0_0] : memref<1x1024xf32, #tpu.memory_space<vmem>>, vector<1x1024xf32>
    %c0_1 = arith.constant 0 : index
    %c0_2 = arith.constant 0 : index
    %1 = vector.load %arg2[%c0_1, %c0_2] : memref<1x1024xf32, #tpu.memory_space<vmem>>, vector<1x1024xf32>
    tpu.vector_store %arg2[%c0_1, %c0_2], %0 {strides = array<i32>} : memref<1x1024xf32, #tpu.memory_space<vmem>>, vector<1x1024xf32>,
    return
  }
  func.func @transform_0(%arg0: i32) -> (i32, i32) {
    %c0_i32 = arith.constant 0 : i32
    %c0_i32_0 = arith.constant 0 : i32
    return %arg0, %c0_i32 : i32, i32
  }
  func.func @transform_1(%arg0: i32) -> (i32, i32) {
    %c0_i32 = arith.constant 0 : i32
    %c0_i32_0 = arith.constant 0 : i32
    return %arg0, %c0_i32 : i32, i32
  }
}

</mosaic_0001>

<llo_original>
// kernel: tpu_custom_call.1
$region0: #{tpu_custom_call.1}
  #allocation0 [shape = 'u32[]', space=smem, size = 0x4, offset = 0x4, fixed_abs, tag = 'smem constant byte address 0x4 - core index']
  #allocation1 [shape = 'u32[72,128]{1,0:T(1,128)}', space=vmem, size = 0x9000, scoped, tag = 'internal scratch']
  %s0 = inlined_call_operand.hbm [shape: f32[1,1024], index: 0, kind: input, shape index: {}, may-alias: {0,1}]
  %s1 = inlined_call_operand.hbm [shape: f32[1,1024], index: 1, kind: output, shape index: {}, may-alias: {0,1}]
  %s2 = sld [smem:[#allocation0]]
  $region18: #{tpu_custom_call.1} parent=0
    _
  %s4 = ssub.s32 1, %s2
  %s5 = scalar_select 0, %s4, %s2
  $region1: #{tpu_custom_call.1} parent=0
    #allocation2 [shape = 'u8[4096]{0}', space=vmem, size = 0x1000, scoped, tag = 'input window, operand 0, single buffered']
    #allocation3 [shape = 's32[1]{0}', space=sflag, size = 0x4, scoped, tag = 'scoped memory for tpu_custom_call.1']
    #allocation4 [shape = 's32[1]{0}', space=sflag, size = 0x4, scoped, tag = 'scoped memory for tpu_custom_call.1']
    #allocation5 [shape = 'u8[4096]{0}', space=vmem, size = 0x1000, scoped, tag = 'output window, operand 0, single buffered']
    %6 = vsyncpa [#allocation3], 0
    %7 = vsyncpa [#allocation4], 0
    // Predicated region
    $region2: #{tpu_custom_call.1} parent=1 // pred_check
      _
    $region3: #{tpu_custom_call.1} parent=1 // pred_check_branch
      %9 = sbr.rel (0) target = $region5
    $region4: #{tpu_custom_call.1} parent=1 // pred_region
      %11 = vsyncadd [#allocation3], 0
      %s13 = sshll.u32 %s0, 4
      %s14 = int_to_ptr.hbm [resolvable:$true] %s13
      %s15 = sshll.u32 [#allocation2], 4
      %s16 = int_to_ptr.vmem [resolvable:$true] %s15
      %18 = dma.hbm_to_vmem [thread:$0]  %s14, 128, %s16, [#allocation3]
    $region5: #{tpu_custom_call.1} parent=1 // pred_fallthru
      _
    // Predicated region
    $region6: #{tpu_custom_call.1} parent=1 // pred_check
      _
    $region7: #{tpu_custom_call.1} parent=1 // pred_check_branch
      %20 = sbr.rel (0) target = $region9
    $region8: #{tpu_custom_call.1} parent=1 // pred_region
      %22 = dma.done [#allocation3], 128
    $region9: #{tpu_custom_call.1} parent=1 // pred_fallthru
      _
    %v23 = vld [vmem:[#allocation2] sm:$0xff]
    %24 = vst [vmem:[#allocation5] sm:$0xff] %v23
    // Predicated region
    $region10: #{tpu_custom_call.1} parent=1 // pred_check
      _
    $region11: #{tpu_custom_call.1} parent=1 // pred_check_branch
      %26 = sbr.rel (0) target = $region13
    $region12: #{tpu_custom_call.1} parent=1 // pred_region
      %28 = vsyncadd [#allocation4], 0
      %s30 = sshll.u32 [#allocation5], 4
      %s31 = int_to_ptr.vmem [resolvable:$true] %s30
      %s32 = sshll.u32 %s1, 4
      %s33 = int_to_ptr.hbm [resolvable:$true] %s32
      %35 = dma.vmem_to_hbm [thread:$0]  %s31, 128, %s33, [#allocation4]
    $region13: #{tpu_custom_call.1} parent=1 // pred_fallthru
      _
    // Predicated region
    $region14: #{tpu_custom_call.1} parent=1 // pred_check
      _
    $region15: #{tpu_custom_call.1} parent=1 // pred_check_branch
      %37 = sbr.rel (0) target = $region17
    $region16: #{tpu_custom_call.1} parent=1 // pred_region
      %39 = dma.done [#allocation4], 128
    $region17: #{tpu_custom_call.1} parent=1 // pred_fallthru
      _
    %40 = vsyncpa [#allocation3], 1
    %41 = vsyncpa [#allocation4], 1

</llo_original>
